<compile_context>
chip_gen: v6e
topology: v6e:2x2x1
jax: 0.10.0
libtpu: 0.0.40
codegen_flags: <defaults>
</compile_context>

<pallas_src>
import numpy as np
import jax
import jax.numpy as jnp
from jax.experimental import pallas as pl
from jax.experimental.pallas import tpu as pltpu

LANE = 128          # every feature dim padded to a full vreg lane width
NEG_INF = -1e30


# ----------------------------------------------------------------------------
# small helpers
# ----------------------------------------------------------------------------
def _round_up(x, m):
    return ((x + m - 1) // m) * m


def _pad2(a, rows, cols, dtype):
    out = jnp.zeros((rows, cols), dtype)
    return out.at[: a.shape[0], : a.shape[1]].set(a.astype(dtype))


def _rep_spec(arr):
    """Full-array block replicated across the whole grid (weights / biases)."""
    nd = arr.ndim
    return pl.BlockSpec(arr.shape, lambda *_: (0,) * nd)


def _row_tiles(rows, cap):
    """Pick (padded_rows, row_block) with padded_rows % row_block == 0."""
    rp = _round_up(max(rows, 1), 16)
    if rp <= cap:
        return rp, rp
    return _round_up(rp, cap), cap


# ----------------------------------------------------------------------------
# Pallas kernels
# ----------------------------------------------------------------------------
def _mlp3_kernel(x_ref, w1, b1, w2, b2, w3, b3, o_ref):
    """Fused 3-layer MLP: relu(relu(x@W1+b1)@W2+b2)@W3+b3, f32 accumulation."""
    h = jnp.dot(x_ref[...], w1[...], preferred_element_type=jnp.float32) + b1[...]
    h = jnp.maximum(h, 0.0).astype(jnp.bfloat16)
    h = jnp.dot(h, w2[...], preferred_element_type=jnp.float32) + b2[...]
    h = jnp.maximum(h, 0.0).astype(jnp.bfloat16)
    o_ref[...] = (jnp.dot(h, w3[...], preferred_element_type=jnp.float32)
                  + b3[...]).astype(o_ref.dtype)


def mlp3(x_pad, p, *, block_rows, out_dtype=jnp.float32):
    """Row-tiled fused MLP.  x_pad: (R_pad, Din_pad) bf16, R_pad % block_rows == 0."""
    w1, b1, w2, b2, w3, b3 = p
    rp, dout = x_pad.shape[0], w3.shape[1]
    return pl.pallas_call(
        _mlp3_kernel,
        out_shape=jax.ShapeDtypeStruct((rp, dout), out_dtype),
        grid=(rp // block_rows,),
        in_specs=[pl.BlockSpec((block_rows, x_pad.shape[1]), lambda i: (i, 0))]
                 + [_rep_spec(a) for a in (w1, b1, w2, b2, w3, b3)],
        out_specs=pl.BlockSpec((block_rows, dout), lambda i: (i, 0)),
        compiler_params=pltpu.CompilerParams(dimension_semantics=("parallel",)),
    )(x_pad, w1, b1, w2, b2, w3, b3)


def _edge_mlp_kernel(hs_ref, hd_ref, w1a, w1b, b1, w2, b2, w3, b3, o_ref):
    """Edge decoder with the [h_src, h_dst] concat folded into a split W1."""
    h = (jnp.dot(hs_ref[...], w1a[...], preferred_element_type=jnp.float32)
         + jnp.dot(hd_ref[...], w1b[...], preferred_element_type=jnp.float32)
         + b1[...])
    h = jnp.maximum(h, 0.0).astype(jnp.bfloat16)
    h = jnp.dot(h, w2[...], preferred_element_type=jnp.float32) + b2[...]
    h = jnp.maximum(h, 0.0).astype(jnp.bfloat16)
    o_ref[...] = (jnp.dot(h, w3[...], preferred_element_type=jnp.float32)
                  + b3[...]).astype(o_ref.dtype)


def edge_mlp3(hs_pad, hd_pad, p, *, block_rows):
    w1a, w1b, b1, w2, b2, w3, b3 = p
    rp, dout = hs_pad.shape[0], w3.shape[1]
    return pl.pallas_call(
        _edge_mlp_kernel,
        out_shape=jax.ShapeDtypeStruct((rp, dout), jnp.float32),
        grid=(rp // block_rows,),
        in_specs=[pl.BlockSpec((block_rows, hs_pad.shape[1]), lambda i: (i, 0)),
                  pl.BlockSpec((block_rows, hd_pad.shape[1]), lambda i: (i, 0))]
                 + [_rep_spec(a) for a in (w1a, w1b, b1, w2, b2, w3, b3)],
        out_specs=pl.BlockSpec((block_rows, dout), lambda i: (i, 0)),
        compiler_params=pltpu.CompilerParams(dimension_semantics=("parallel",)),
    )(hs_pad, hd_pad, w1a, w1b, b1, w2, b2, w3, b3)


def _gatv2_kernel(hi_ref, hj_ref, adj_ref, wl, bl, wr, br, att, bias, o_ref,
                  xr_s, m_s, l_s, acc_s):
    """Tiled dense single-head GATv2 (negative_slope=0.2), online softmax over
    the source axis.  adj[i, j] == 1 iff edge source j -> target i (self-loops
    included).  Matches PyG GATv2Conv:
        e_ij  = att . leaky_relu(lin_r(x_i) + lin_l(x_j))
        alpha = softmax_j(e_ij)
        out_i = sum_j alpha_ij * lin_l(x_j) + bias
    """
    j = pl.program_id(1)
    nj = pl.num_programs(1)

    @pl.when(j == 0)
    def _():
        xr_s[...] = jnp.dot(hi_ref[...], wr[...],
                            preferred_element_type=jnp.float32) + br[...]
        m_s[...] = jnp.full(m_s.shape, NEG_INF, jnp.float32)
        l_s[...] = jnp.zeros_like(l_s)
        acc_s[...] = jnp.zeros_like(acc_s)

    # source-side projection of the current source tile
    xl = jnp.dot(hj_ref[...], wl[...], preferred_element_type=jnp.float32) + bl[...]

    # attention logits for this (target tile, source tile) block
    s = xr_s[...][:, None, :] + xl[None, :, :]            # (tm, tn, Hp) f32
    s = jnp.where(s > 0, s, 0.2 * s)                      # LeakyReLU(0.2)
    e = jnp.sum(s * att[...], axis=-1)                    # (tm, tn)

    # online softmax over sources, masked once (masked exp -> 0)
    m_prev = m_s[...]
    m_new = jnp.maximum(m_prev, jnp.max(e, axis=1, keepdims=True))
    a = jnp.exp(m_prev - m_new)
    p = jnp.where(adj_ref[...] > 0, jnp.exp(e - m_new), 0.0)
    l_s[...] = a * l_s[...] + jnp.sum(p, axis=1, keepdims=True)
    acc_s[...] = a * acc_s[...] + jnp.dot(
        p.astype(jnp.bfloat16), xl.astype(jnp.bfloat16),
        preferred_element_type=jnp.float32)
    m_s[...] = m_new

    @pl.when(j == nj - 1)
    def _():
        inv = pl.reciprocal(jnp.maximum(l_s[...], 1e-20), approx=True)
        o_ref[...] = (acc_s[...] * inv + bias[...]).astype(o_ref.dtype)


def gatv2(h_pad, adj_pad, gp, *, tm, tn):
    n_pad, hp = h_pad.shape
    return pl.pallas_call(
        _gatv2_kernel,
        out_shape=jax.ShapeDtypeStruct((n_pad, hp), jnp.bfloat16),
        grid=(n_pad // tm, n_pad // tn),
        in_specs=[pl.BlockSpec((tm, hp), lambda i, j: (i, 0)),    # target rows
                  pl.BlockSpec((tn, hp), lambda i, j: (j, 0)),    # source rows
                  pl.BlockSpec((tm, tn), lambda i, j: (i, j))]    # adjacency tile
                 + [_rep_spec(gp[k]) for k in ("wl", "bl", "wr", "br",
                                               "att", "bias")],
        out_specs=pl.BlockSpec((tm, hp), lambda i, j: (i, 0)),
        scratch_shapes=[pltpu.VMEM((tm, hp), jnp.float32),   # xr projection
                        pltpu.VMEM((tm, 1), jnp.float32),    # running max
                        pltpu.VMEM((tm, 1), jnp.float32),    # running denom
                        pltpu.VMEM((tm, hp), jnp.float32)],  # running numer
        compiler_params=pltpu.CompilerParams(
            dimension_semantics=("parallel", "arbitrary")),
    )(h_pad, h_pad, adj_pad, gp["wl"], gp["bl"], gp["wr"], gp["br"],
      gp["att"], gp["bias"])


def _pool_global_kernel(oh_ref, h_ref, cnt_ref, w1, b1, w2, b2, w3, b3,
                        o_ref, acc_ref):
    """Global mean pool (accumulated over node tiles) fused with the global
    decoder MLP at the last grid step."""
    k = pl.program_id(0)

    @pl.when(k == 0)
    def _():
        acc_ref[...] = jnp.zeros_like(acc_ref)

    acc_ref[...] += jnp.dot(oh_ref[...], h_ref[...],
                            preferred_element_type=jnp.float32)

    @pl.when(k == pl.num_programs(0) - 1)
    def _():
        pooled = (acc_ref[...] / cnt_ref[...]).astype(jnp.bfloat16)
        h = jnp.dot(pooled, w1[...], preferred_element_type=jnp.float32) + b1[...]
        h = jnp.maximum(h, 0.0).astype(jnp.bfloat16)
        h = jnp.dot(h, w2[...], preferred_element_type=jnp.float32) + b2[...]
        h = jnp.maximum(h, 0.0).astype(jnp.bfloat16)
        o_ref[...] = jnp.dot(h, w3[...], preferred_element_type=jnp.float32) + b3[...]


def pool_global(onehot_pad, h_pad, counts, p, *, tile):
    w1, b1, w2, b2, w3, b3 = p
    g_pad = onehot_pad.shape[0]
    n_pad, hp = h_pad.shape
    dout = w3.shape[1]
    return pl.pallas_call(
        _pool_global_kernel,
        out_shape=jax.ShapeDtypeStruct((g_pad, dout), jnp.float32),
        grid=(n_pad // tile,),
        in_specs=[pl.BlockSpec((g_pad, tile), lambda k: (0, k)),
                  pl.BlockSpec((tile, hp), lambda k: (k, 0)),
                  _rep_spec(counts)]
                 + [_rep_spec(a) for a in (w1, b1, w2, b2, w3, b3)],
        out_specs=pl.BlockSpec((g_pad, dout), lambda k: (0, 0)),
        scratch_shapes=[pltpu.VMEM((g_pad, hp), jnp.float32)],
        compiler_params=pltpu.CompilerParams(dimension_semantics=("arbitrary",)),
    )(onehot_pad, h_pad, counts, w1, b1, w2, b2, w3, b3)


# ----------------------------------------------------------------------------
# Parameter construction (xavier-uniform like the PyTorch code, lane-padded)
# ----------------------------------------------------------------------------
def glorot(key, shape):
    fan_in, fan_out = shape[0], shape[-1]
    limit = float(np.sqrt(6.0 / (fan_in + fan_out)))
    return jax.random.uniform(key, shape, jnp.float32, -limit, limit)


def make_mlp_params(key, in_dim, hidden, out_dim):
    k = jax.random.split(key, 3)
    dip = _round_up(in_dim, LANE)
    hp = _round_up(hidden, LANE)
    dop = _round_up(out_dim, LANE)
    return (_pad2(glorot(k[0], (in_dim, hidden)), dip, hp, jnp.bfloat16),
            jnp.zeros((1, hp), jnp.float32),
            _pad2(glorot(k[1], (hidden, hidden)), hp, hp, jnp.bfloat16),
            jnp.zeros((1, hp), jnp.float32),
            _pad2(glorot(k[2], (hidden, out_dim)), hp, dop, jnp.bfloat16),
            jnp.zeros((1, dop), jnp.float32))


def make_edge_mlp_params(key, hidden, out_dim):
    k = jax.random.split(key, 3)
    hp = _round_up(hidden, LANE)
    dop = _round_up(out_dim, LANE)
    w1 = glorot(k[0], (2 * hidden, hidden))      # the (2H -> H) first layer, split
    return (_pad2(w1[:hidden], hp, hp, jnp.bfloat16),    # acts on h[src]
            _pad2(w1[hidden:], hp, hp, jnp.bfloat16),    # acts on h[dst]
            jnp.zeros((1, hp), jnp.float32),
            _pad2(glorot(k[1], (hidden, hidden)), hp, hp, jnp.bfloat16),
            jnp.zeros((1, hp), jnp.float32),
            _pad2(glorot(k[2], (hidden, out_dim)), hp, dop, jnp.bfloat16),
            jnp.zeros((1, dop), jnp.float32))


def make_gat_params(key, hidden):
    k = jax.random.split(key, 3)
    hp = _round_up(hidden, LANE)
    att = jnp.zeros((1, 1, hp), jnp.float32)
    att = att.at[0, 0, :hidden].set(glorot(k[2], (1, hidden))[0])
    return dict(
        wl=_pad2(glorot(k[0], (hidden, hidden)), hp, hp, jnp.bfloat16),
        bl=jnp.zeros((1, hp), jnp.float32),
        wr=_pad2(glorot(k[1], (hidden, hidden)), hp, hp, jnp.bfloat16),
        br=jnp.zeros((1, hp), jnp.float32),
        att=att,
        bias=jnp.zeros((1, hp), jnp.float32))


def make_gran_params(key, nb_layer, in_dim_node, out_dim_node, hidden_dim,
                     nb_max_node, dim_order_embedding, nb_k):
    keys = jax.random.split(key, 6 + nb_layer)
    return dict(
        node_embedding=glorot(keys[0], (nb_max_node, dim_order_embedding)),
        encoder=make_mlp_params(keys[1], in_dim_node + dim_order_embedding,
                                hidden_dim, hidden_dim),
        dec_edge=make_edge_mlp_params(keys[2], hidden_dim, nb_k),
        dec_node=make_mlp_params(keys[3], hidden_dim, hidden_dim, out_dim_node),
        dec_global=make_mlp_params(keys[4], hidden_dim, hidden_dim, nb_k),
        gnn=[make_gat_params(keys[6 + i], hidden_dim) for i in range(nb_layer)])


# ----------------------------------------------------------------------------
# GRAN forward
# ----------------------------------------------------------------------------
def gran_forward(params, x, node_counts, edge_index, batch, block_index,
                 edge_imaginary_index, *, out_dim_node, nb_k):
    """node_counts: python list of per-graph node counts (== graph.batch histogram)."""
    N = x.shape[0]
    G = len(node_counts)
    E = edge_imaginary_index.shape[1]
    B = block_index.shape[0]

    # ordering embedding: last nb_nodes rows of node_embedding per graph (glue)
    node_emb = params["node_embedding"]
    emb = jnp.concatenate([node_emb[-c:] for c in node_counts], axis=0)
    nodes = jnp.concatenate([x, emb], axis=1)

    # node-row tiling shared by encoder, GAT layers and the pool kernel
    n_pad, tile = _row_tiles(N, 128)
    tm = tile if tile < 128 else 64      # target tile (keeps (tm,tn,H) temp small)
    tn = tile                            # source tile (lane-dense adjacency blocks)
    din_pad = params["encoder"][0].shape[0]
    nodes_pad = _pad2(nodes, n_pad, din_pad, jnp.bfloat16)

    # encoder MLP (Pallas, row-tiled, bf16)
    h = mlp3(nodes_pad, params["encoder"], block_rows=tile,
             out_dtype=jnp.bfloat16)                        # (n_pad, Hp) bf16

    # dense adjacency mask A[target, source] with self-loops on every row
    A = jnp.zeros((n_pad, n_pad), jnp.float32)
    A = A.at[edge_index[1], edge_index[0]].set(1.0)
    A = A.at[jnp.arange(n_pad), jnp.arange(n_pad)].set(1.0)
    A = A.astype(jnp.bfloat16)

    # GATv2 stack (Pallas, tiled flash-style attention)
    for gp in params["gnn"]:
        h = gatv2(h, A, gp, tm=tm, tn=tn)

    # global mean pool fused with the global decoder (Pallas)
    g_pad = _round_up(max(G, 1), 16)
    batch_pad = jnp.concatenate(
        [batch.astype(jnp.int32), jnp.full((n_pad - N,), G, jnp.int32)])
    onehot = (jnp.arange(g_pad, dtype=jnp.int32)[:, None]
              == batch_pad[None, :]).astype(jnp.bfloat16)   # (g_pad, n_pad)
    counts = jnp.maximum(
        jnp.sum(onehot.astype(jnp.float32), axis=1, keepdims=True), 1.0)
    global_out = pool_global(onehot, h, counts, params["dec_global"],
                             tile=tile)[:G, :nb_k]

    # imaginary-edge decoder (Pallas), concat folded into split W1
    e_pad, e_tile = _row_tiles(E, 256)
    src_idx = jnp.pad(edge_imaginary_index[0].astype(jnp.int32), (0, e_pad - E))
    dst_idx = jnp.pad(edge_imaginary_index[1].astype(jnp.int32), (0, e_pad - E))
    hs = jnp.take(h, src_idx, axis=0)
    hd = jnp.take(h, dst_idx, axis=0)
    edges_prob = edge_mlp3(hs, hd, params["dec_edge"],
                           block_rows=e_tile)[:E, :nb_k]

    # block-node decoder (Pallas)
    b_pad, b_tile = _row_tiles(B, 256)
    blk_idx = jnp.pad(block_index.astype(jnp.int32), (0, b_pad - B))
    node_out = mlp3(jnp.take(h, blk_idx, axis=0), params["dec_node"],
                    block_rows=b_tile)[:B, :out_dim_node]

    return node_out, edges_prob, global_out


# ----------------------------------------------------------------------------
# Demo
# ----------------------------------------------------------------------------
if __name__ == "__main__":
    # small config consistent with the module
    nb_layer = 2
    in_dim_node = 4
    out_dim_node = 4
    hidden_dim = 32
    nb_max_node = 16
    dim_order_embedding = 4
    nb_k = 8

    key = jax.random.PRNGKey(0)
    kp, kx = jax.random.split(key)
    params = make_gran_params(kp, nb_layer, in_dim_node, out_dim_node,
                              hidden_dim, nb_max_node, dim_order_embedding, nb_k)

    # two graphs of 6 nodes each -> N = 12
    node_counts = [6, 6]
    N = sum(node_counts)
    x = jax.random.normal(kx, (N, in_dim_node), jnp.float32)
    batch = jnp.array([0] * 6 + [1] * 6, dtype=jnp.int32)

    # undirected chain inside each graph (both directions)
    src, dst = [], []
    for off in (0, 6):
        for a in range(5):
            src += [off + a, off + a + 1]
            dst += [off + a + 1, off + a]
    edge_index = jnp.array([src, dst], dtype=jnp.int32)          # (2, 20)

    # block node = last node of each graph; imaginary edges: block -> previous nodes
    block_index = jnp.array([5, 11], dtype=jnp.int32)
    im_src = [5] * 5 + [11] * 5
    im_dst = [0, 1, 2, 3, 4, 6, 7, 8, 9, 10]
    edge_imaginary_index = jnp.array([im_src, im_dst], dtype=jnp.int32)  # (2, 10)

    node_out, edges_prob, global_out = gran_forward(
        params, x, node_counts, edge_index, batch, block_index,
        edge_imaginary_index, out_dim_node=out_dim_node, nb_k=nb_k)

    jax.block_until_ready((node_out, edges_prob, global_out))
    assert node_out.shape == (2, out_dim_node)
    assert edges_prob.shape == (10, nb_k)
    assert global_out.shape == (2, nb_k)
    assert bool(jnp.isfinite(node_out).all())
    assert bool(jnp.isfinite(edges_prob).all())
    assert bool(jnp.isfinite(global_out).all())
    print("KERNEL_OK")
</pallas_src>

<mosaic_0001>
module attributes {stable_mosaic.version = 11 : i64} {
  func.func @_mlp3_kernel(%arg0: i32, %arg1: memref<16x128xbf16, #tpu.memory_space<vmem>>, %arg2: memref<128x128xbf16, #tpu.memory_space<vmem>>, %arg3: memref<1x128xf32, #tpu.memory_space<vmem>>, %arg4: memref<128x128xbf16, #tpu.memory_space<vmem>>, %arg5: memref<1x128xf32, #tpu.memory_space<vmem>>, %arg6: memref<128x128xbf16, #tpu.memory_space<vmem>>, %arg7: memref<1x128xf32, #tpu.memory_space<vmem>>, %arg8: memref<16x128xbf16, #tpu.memory_space<vmem>>) attributes {dimension_semantics = [#tpu.dimension_semantics<parallel>], iteration_bounds = array<i64: 1>, scalar_prefetch = 0 : i64, scratch_operands = 0 : i64, tpu.core_type = #tpu.core_type<tc>, window_params = [{transform_indices = @transform_0, window_bounds = array<i64: 16, 128>}, {pipeline_mode = #tpu.pipeline_mode<synchronous>, transform_indices = @transform_1, window_bounds = array<i64: 128, 128>}, {pipeline_mode = #tpu.pipeline_mode<synchronous>, transform_indices = @transform_2, window_bounds = array<i64: 1, 128>}, {pipeline_mode = #tpu.pipeline_mode<synchronous>, transform_indices = @transform_3, window_bounds = array<i64: 128, 128>}, {pipeline_mode = #tpu.pipeline_mode<synchronous>, transform_indices = @transform_4, window_bounds = array<i64: 1, 128>}, {pipeline_mode = #tpu.pipeline_mode<synchronous>, transform_indices = @transform_5, window_bounds = array<i64: 128, 128>}, {pipeline_mode = #tpu.pipeline_mode<synchronous>, transform_indices = @transform_6, window_bounds = array<i64: 1, 128>}, {transform_indices = @transform_7, window_bounds = array<i64: 16, 128>}]} {
    %c0 = arith.constant 0 : index
    %c0_0 = arith.constant 0 : index
    %0 = vector.load %arg1[%c0, %c0_0] : memref<16x128xbf16, #tpu.memory_space<vmem>>, vector<16x128xbf16>
    %c0_1 = arith.constant 0 : index
    %c0_2 = arith.constant 0 : index
    %1 = vector.load %arg2[%c0_1, %c0_2] : memref<128x128xbf16, #tpu.memory_space<vmem>>, vector<128x128xbf16>
    %cst = arith.constant dense<0.000000e+00> : vector<16x128xf32>
    %2 = tpu.matmul %0, %1, %cst {dimension_numbers = #tpu.dot_dimension_numbers<[1], [0], [0], [1], [0, 0, 1, 1], [], []>} : vector<16x128xbf16>, vector<128x128xbf16>, vector<16x128xf32> -> vector<16x128xf32>
    %c0_3 = arith.constant 0 : index
    %c0_4 = arith.constant 0 : index
    %3 = vector.load %arg3[%c0_3, %c0_4] : memref<1x128xf32, #tpu.memory_space<vmem>>, vector<1x128xf32>
    %4 = vector.broadcast %3 : vector<1x128xf32> to vector<16x128xf32>
    %5 = arith.addf %2, %4 : vector<16x128xf32>
    %cst_5 = arith.constant 0.000000e+00 : f32
    %6 = vector.broadcast %cst_5 : f32 to vector<16x128xf32>
    %7 = arith.maximumf %5, %6 : vector<16x128xf32>
    %8 = arith.truncf %7 : vector<16x128xf32> to vector<16x128xbf16>
    %c0_6 = arith.constant 0 : index
    %c0_7 = arith.constant 0 : index
    %9 = vector.load %arg4[%c0_6, %c0_7] : memref<128x128xbf16, #tpu.memory_space<vmem>>, vector<128x128xbf16>
    %cst_8 = arith.constant dense<0.000000e+00> : vector<16x128xf32>
    %10 = tpu.matmul %8, %9, %cst_8 {dimension_numbers = #tpu.dot_dimension_numbers<[1], [0], [0], [1], [0, 0, 1, 1], [], []>} : vector<16x128xbf16>, vector<128x128xbf16>, vector<16x128xf32> -> vector<16x128xf32>
    %c0_9 = arith.constant 0 : index
    %c0_10 = arith.constant 0 : index
    %11 = vector.load %arg5[%c0_9, %c0_10] : memref<1x128xf32, #tpu.memory_space<vmem>>, vector<1x128xf32>
    %12 = vector.broadcast %11 : vector<1x128xf32> to vector<16x128xf32>
    %13 = arith.addf %10, %12 : vector<16x128xf32>
    %cst_11 = arith.constant 0.000000e+00 : f32
    %14 = vector.broadcast %cst_11 : f32 to vector<16x128xf32>
    %15 = arith.maximumf %13, %14 : vector<16x128xf32>
    %16 = arith.truncf %15 : vector<16x128xf32> to vector<16x128xbf16>
    %c0_12 = arith.constant 0 : index
    %c0_13 = arith.constant 0 : index
    %17 = vector.load %arg6[%c0_12, %c0_13] : memref<128x128xbf16, #tpu.memory_space<vmem>>, vector<128x128xbf16>
    %cst_14 = arith.constant dense<0.000000e+00> : vector<16x128xf32>
    %18 = tpu.matmul %16, %17, %cst_14 {dimension_numbers = #tpu.dot_dimension_numbers<[1], [0], [0], [1], [0, 0, 1, 1], [], []>} : vector<16x128xbf16>, vector<128x128xbf16>, vector<16x128xf32> -> vector<16x128xf32>
    %c0_15 = arith.constant 0 : index
    %c0_16 = arith.constant 0 : index
    %19 = vector.load %arg7[%c0_15, %c0_16] : memref<1x128xf32, #tpu.memory_space<vmem>>, vector<1x128xf32>
    %20 = vector.broadcast %19 : vector<1x128xf32> to vector<16x128xf32>
    %21 = arith.addf %18, %20 : vector<16x128xf32>
    %22 = arith.truncf %21 : vector<16x128xf32> to vector<16x128xbf16>
    %c0_17 = arith.constant 0 : index
    %c0_18 = arith.constant 0 : index
    %23 = vector.load %arg8[%c0_17, %c0_18] : memref<16x128xbf16, #tpu.memory_space<vmem>>, vector<16x128xbf16>
    tpu.vector_store %arg8[%c0_17, %c0_18], %22 {strides = array<i32>} : memref<16x128xbf16, #tpu.memory_space<vmem>>, vector<16x128xbf16>,
    return
  }
  func.func @transform_0(%arg0: i32) -> (i32, i32) {
    %c0_i32 = arith.constant 0 : i32
    %c0_i32_0 = arith.constant 0 : i32
    return %arg0, %c0_i32 : i32, i32
  }
  func.func @transform_1(%arg0: i32) -> (i32, i32) {
    %c0_i32 = arith.constant 0 : i32
    %c0_i32_0 = arith.constant 0 : i32
    %c0_i32_1 = arith.constant 0 : i32
    return %c0_i32, %c0_i32_0 : i32, i32
  }
  func.func @transform_2(%arg0: i32) -> (i32, i32) {
    %c0_i32 = arith.constant 0 : i32
    %c0_i32_0 = arith.constant 0 : i32
    %c0_i32_1 = arith.constant 0 : i32
    return %c0_i32, %c0_i32_0 : i32, i32
  }
  func.func @transform_3(%arg0: i32) -> (i32, i32) {
    %c0_i32 = arith.constant 0 : i32
    %c0_i32_0 = arith.constant 0 : i32
    %c0_i32_1 = arith.constant 0 : i32
    return %c0_i32, %c0_i32_0 : i32, i32
  }
  func.func @transform_4(%arg0: i32) -> (i32, i32) {
    %c0_i32 = arith.constant 0 : i32
    %c0_i32_0 = arith.constant 0 : i32
    %c0_i32_1 = arith.constant 0 : i32
    return %c0_i32, %c0_i32_0 : i32, i32
  }
  func.func @transform_5(%arg0: i32) -> (i32, i32) {
    %c0_i32 = arith.constant 0 : i32
    %c0_i32_0 = arith.constant 0 : i32
    %c0_i32_1 = arith.constant 0 : i32
    return %c0_i32, %c0_i32_0 : i32, i32
  }
  func.func @transform_6(%arg0: i32) -> (i32, i32) {
    %c0_i32 = arith.constant 0 : i32
    %c0_i32_0 = arith.constant 0 : i32
    %c0_i32_1 = arith.constant 0 : i32
    return %c0_i32, %c0_i32_0 : i32, i32
  }
  func.func @transform_7(%arg0: i32) -> (i32, i32) {
    %c0_i32 = arith.constant 0 : i32
    %c0_i32_0 = arith.constant 0 : i32
    return %arg0, %c0_i32 : i32, i32
  }
}

</mosaic_0001>

<llo_original>
// kernel: tpu_custom_call.1
$region0: #{tpu_custom_call.1}
  #allocation0 [shape = 'u32[]', space=smem, size = 0x4, offset = 0x4, fixed_abs, tag = 'smem constant byte address 0x4 - core index']
  #allocation1 [shape = 'u32[144,128]{1,0:T(1,128)}', space=vmem, size = 0x12000, scoped, tag = 'internal scratch']
  %s0 = inlined_call_operand.hbm [shape: bf16[16,128], index: 0, kind: input, shape index: {}]
  %s1 = inlined_call_operand.hbm [shape: bf16[128,128], index: 1, kind: input, shape index: {}]
  %s2 = inlined_call_operand.vmem [shape: f32[1,128], index: 2, kind: input, shape index: {}]
  %s3 = inlined_call_operand.hbm [shape: bf16[128,128], index: 3, kind: input, shape index: {}]
  %s4 = inlined_call_operand.vmem [shape: f32[1,128], index: 4, kind: input, shape index: {}]
  %s5 = inlined_call_operand.hbm [shape: bf16[128,128], index: 5, kind: input, shape index: {}]
  %s6 = inlined_call_operand.vmem [shape: f32[1,128], index: 6, kind: input, shape index: {}]
  %s7 = inlined_call_operand.hbm [shape: bf16[16,128], index: 7, kind: output, shape index: {}]
  %s8 = sld [smem:[#allocation0]]
  $region54: #{tpu_custom_call.1} parent=0
    _
  %s10 = ssub.s32 1, %s8
  %s11 = scalar_select 0, %s10, %s8
  $region1: #{tpu_custom_call.1} parent=0
    #allocation2 [shape = 'u8[4096]{0}', space=vmem, size = 0x1000, scoped, tag = 'input window, operand 0, single buffered']
    #allocation3 [shape = 's32[1]{0}', space=sflag, size = 0x4, scoped, tag = 'scoped memory for tpu_custom_call.1']
    #allocation4 [shape = 's32[1]{0}', space=sflag, size = 0x4, scoped, tag = 'scoped memory for tpu_custom_call.1']
    #allocation5 [shape = 'u8[32768]{0}', space=vmem, size = 0x8000, scoped, tag = 'input window, operand 1, single buffered']
    #allocation6 [shape = 's32[1]{0}', space=sflag, size = 0x4, scoped, tag = 'scoped memory for tpu_custom_call.1']
    #allocation7 [shape = 'u8[32768]{0}', space=vmem, size = 0x8000, scoped, tag = 'input window, operand 3, single buffered']
    #allocation8 [shape = 'u8[32768]{0}', space=vmem, size = 0x8000, scoped, tag = 'input window, operand 5, single buffered']
    #allocation9 [shape = 's32[1]{0}', space=sflag, size = 0x4, scoped, tag = 'scoped memory for tpu_custom_call.1']
    #allocation10 [shape = 'u8[4096]{0}', space=vmem, size = 0x1000, scoped, tag = 'output window, operand 0, single buffered']
    %12 = vsyncpa [#allocation3], 0
    %13 = vsyncpa [#allocation6], 0
    %14 = vsyncpa [#allocation9], 0
    %15 = vsyncpa [#allocation4], 0
    // Predicated region
    $region2: #{tpu_custom_call.1} parent=1 // pred_check
      _
    $region3: #{tpu_custom_call.1} parent=1 // pred_check_branch
      %17 = sbr.rel (0) target = $region5
    $region4: #{tpu_custom_call.1} parent=1 // pred_region
      %s19 = ssub.s32 128, 128
      %20 = vsyncadd [#allocation3], %s19
      %s21 = sshll.u32 [#allocation2], 4
      %s22 = int_to_ptr.vmem [resolvable:$true] %s21
      %27 = dma.hbm_to_vmem [thread:$0]  %s0, 128, %s22, [#allocation3], 64, 64, 4
    $region5: #{tpu_custom_call.1} parent=1 // pred_fallthru
      _
    // Predicated region
    $region6: #{tpu_custom_call.1} parent=1 // pred_check
      _
    $region7: #{tpu_custom_call.1} parent=1 // pred_check_branch
      %29 = sbr.rel (0) target = $region9
    $region8: #{tpu_custom_call.1} parent=1 // pred_region
      %s31 = ssub.s32 1024, 1024
      %32 = vsyncadd [#allocation6], %s31
      %s33 = sshll.u32 [#allocation5], 4
      %s34 = int_to_ptr.vmem [resolvable:$true] %s33
      %39 = dma.hbm_to_vmem [thread:$0]  %s1, 1024, %s34, [#allocation6], 64, 64, 4
    $region9: #{tpu_custom_call.1} parent=1 // pred_fallthru
      _
    // Predicated region
    $region10: #{tpu_custom_call.1} parent=1 // pred_check
      _
    $region11: #{tpu_custom_call.1} parent=1 // pred_check_branch
      %41 = sbr.rel (0) target = $region13
    $region12: #{tpu_custom_call.1} parent=1 // pred_region
      _
    $region13: #{tpu_custom_call.1} parent=1 // pred_fallthru
      _
    // Predicated region
    $region14: #{tpu_custom_call.1} parent=1 // pred_check
      _
    $region15: #{tpu_custom_call.1} parent=1 // pred_check_branch
      %43 = sbr.rel (0) target = $region17
    $region16: #{tpu_custom_call.1} parent=1 // pred_region
      %s45 = ssub.s32 1024, 1024
      %46 = vsyncadd [#allocation6], %s45
      %s47 = sshll.u32 [#allocation7], 4
      %s48 = int_to_ptr.vmem [resolvable:$true] %s47
      %53 = dma.hbm_to_vmem [thread:$0]  %s3, 1024, %s48, [#allocation6], 64, 64, 4
    $region17: #{tpu_custom_call.1} parent=1 // pred_fallthru
      _
    // Predicated region
    $region18: #{tpu_custom_call.1} parent=1 // pred_check
      _
    $region19: #{tpu_custom_call.1} parent=1 // pred_check_branch
      %55 = sbr.rel (0) target = $region21
    $region20: #{tpu_custom_call.1} parent=1 // pred_region
      _
    $region21: #{tpu_custom_call.1} parent=1 // pred_fallthru
      _
    // Predicated region
    $region22: #{tpu_custom_call.1} parent=1 // pred_check
      _
    $region23: #{tpu_custom_call.1} parent=1 // pred_check_branch
      %57 = sbr.rel (0) target = $region25
    $region24: #{tpu_custom_call.1} parent=1 // pred_region
      %s59 = ssub.s32 1024, 1024
      %60 = vsyncadd [#allocation9], %s59
      %s61 = sshll.u32 [#allocation8], 4
      %s62 = int_to_ptr.vmem [resolvable:$true] %s61
      %67 = dma.hbm_to_vmem [thread:$0]  %s5, 1024, %s62, [#allocation9], 64, 64, 4
    $region25: #{tpu_custom_call.1} parent=1 // pred_fallthru
      _
    // Predicated region
    $region26: #{tpu_custom_call.1} parent=1 // pred_check
      _
    $region27: #{tpu_custom_call.1} parent=1 // pred_check_branch
      %69 = sbr.rel (0) target = $region29
    $region28: #{tpu_custom_call.1} parent=1 // pred_region
      _
    $region29: #{tpu_custom_call.1} parent=1 // pred_fallthru
      _
    // Predicated region
    $region30: #{tpu_custom_call.1} parent=1 // pred_check
      _
    $region31: #{tpu_custom_call.1} parent=1 // pred_check_branch
      %71 = sbr.rel (0) target = $region33
    $region32: #{tpu_custom_call.1} parent=1 // pred_region
      %72 = dma.done [#allocation3], 128
    $region33: #{tpu_custom_call.1} parent=1 // pred_fallthru
      _
    // Predicated region
    $region34: #{tpu_custom_call.1} parent=1 // pred_check
      _
    $region35: #{tpu_custom_call.1} parent=1 // pred_check_branch
      %74 = sbr.rel (0) target = $region37
    $region36: #{tpu_custom_call.1} parent=1 // pred_region
      %75 = dma.done [#allocation6], 1024
    $region37: #{tpu_custom_call.1} parent=1 // pred_fallthru
      _
    // Predicated region
    $region38: #{tpu_custom_call.1} parent=1 // pred_check
      _
    $region39: #{tpu_custom_call.1} parent=1 // pred_check_branch
      %77 = sbr.rel (0) target = $region41
    $region40: #{tpu_custom_call.1} parent=1 // pred_region
      %78 = dma.done [#allocation6], 1024
    $region41: #{tpu_custom_call.1} parent=1 // pred_fallthru
      _
    // Predicated region
    $region42: #{tpu_custom_call.1} parent=1 // pred_check
      _
    $region43: #{tpu_custom_call.1} parent=1 // pred_check_branch
      %80 = sbr.rel (0) target = $region45
    $region44: #{tpu_custom_call.1} parent=1 // pred_region
      %81 = dma.done [#allocation9], 1024
    $region45: #{tpu_custom_call.1} parent=1 // pred_fallthru
      _
    %v83 = vld [vmem:[#allocation2] sm:$0xf]
    %v84 = vld [vmem:[#allocation2 + $0x4] sm:$0xf]
    %v85 = vld [vmem:[#allocation5] sm:$0xf]
    %v86 = vld [vmem:[#allocation5 + $0x4] sm:$0xf]
    %v87 = vld [vmem:[#allocation5 + $0x8] sm:$0xf]
    %v88 = vld [vmem:[#allocation5 + $0xc] sm:$0xf]
    %v89 = vld [vmem:[#allocation5 + $0x10] sm:$0xf]
    %v90 = vld [vmem:[#allocation5 + $0x14] sm:$0xf]
    %v91 = vld [vmem:[#allocation5 + $0x18] sm:$0xf]
    %v92 = vld [vmem:[#allocation5 + $0x1c] sm:$0xf]
    %v93 = vld [vmem:[#allocation5 + $0x20] sm:$0xf]
    %v94 = vld [vmem:[#allocation5 + $0x24] sm:$0xf]
    %v95 = vld [vmem:[#allocation5 + $0x28] sm:$0xf]
    %v96 = vld [vmem:[#allocation5 + $0x2c] sm:$0xf]
    %v97 = vld [vmem:[#allocation5 + $0x30] sm:$0xf]
    %v98 = vld [vmem:[#allocation5 + $0x34] sm:$0xf]
    %v99 = vld [vmem:[#allocation5 + $0x38] sm:$0xf]
    %v100 = vld [vmem:[#allocation5 + $0x3c] sm:$0xf]
    %v101 = vld [vmem:[%s2] sm:$0x1]
    %v103 = vlaneseq
    %v104 = vshrl.u32 %v103, 7
    %v105 = vsub.s32 0, %v104
    %v106 = vrot.slane %v101, %v105
    %v110 = vunpack.c.l.b16 %v83
    %v111 = vunpack.c.l.b16 %v84
    %v112 = vpack.c.b16 %v111, %v110
    %v130 = vunpack.c.l.b16 %v85
    %v131 = vunpack.c.l.b16 %v86
    %v132 = vunpack.c.l.b16 %v87
    %v133 = vunpack.c.l.b16 %v88
    %v134 = vunpack.c.l.b16 %v89
    %v135 = vunpack.c.l.b16 %v90
    %v136 = vunpack.c.l.b16 %v91
    %v137 = vunpack.c.l.b16 %v92
    %v138 = vunpack.c.l.b16 %v93
    %v139 = vunpack.c.l.b16 %v94
    %v140 = vunpack.c.l.b16 %v95
    %v141 = vunpack.c.l.b16 %v96
    %v142 = vunpack.c.l.b16 %v97
    %v143 = vunpack.c.l.b16 %v98
    %v144 = vunpack.c.l.b16 %v99
    %v145 = vunpack.c.l.b16 %v100
    %v146 = vpack.c.b16 %v131, %v130
    %v147 = vpack.c.b16 %v133, %v132
    %v148 = vpack.c.b16 %v135, %v134
    %v149 = vpack.c.b16 %v137, %v136
    %v150 = vpack.c.b16 %v139, %v138
    %v151 = vpack.c.b16 %v141, %v140
    %v152 = vpack.c.b16 %v143, %v142
    %v153 = vpack.c.b16 %v145, %v144
    %162 = vmatprep.subr.bf16.mxu0 0
    %163 = vmatpush1.bf16.msra.mxu0 %v153
    %164 = vmatprep.subr.bf16.mxu0 0
    %165 = vmatpush1.bf16.msra.mxu0 %v152
    %166 = vmatprep.subr.bf16.mxu0 0
    %167 = vmatpush1.bf16.msra.mxu0 %v151
    %168 = vmatprep.subr.bf16.mxu0 0
    %169 = vmatpush1.bf16.msra.mxu0 %v150
    %170 = vmatprep.subr.bf16.mxu0 0
    %171 = vmatpush1.bf16.msra.mxu0 %v149
    %172 = vmatprep.subr.bf16.mxu0 0
    %173 = vmatpush1.bf16.msra.mxu0 %v148
    %174 = vmatprep.subr.bf16.mxu0 0
    %175 = vmatpush1.bf16.msra.mxu0 %v147
    %176 = vmatprep.subr.bf16.mxu0 0
    %177 = vmatpush1.bf16.msra.mxu0 %v146
    %178 = vmatprep.subr.bf16.mxu0 0
    %179 = vmatpush2.bf16.msra.mxu0 0
    %180 = vmatprep.subr.bf16.mxu0 0
    %181 = vmatpush2.bf16.msra.mxu0 0
    %182 = vmatprep.subr.bf16.mxu0 0
    %183 = vmatpush2.bf16.msra.mxu0 0
    %184 = vmatprep.subr.bf16.mxu0 0
    %185 = vmatpush2.bf16.msra.mxu0 0
    %186 = vmatprep.subr.bf16.mxu0 0
    %187 = vmatpush2.bf16.msra.mxu0 0
    %188 = vmatprep.subr.bf16.mxu0 0
    %189 = vmatpush2.bf16.msra.mxu0 0
    %190 = vmatprep.subr.bf16.mxu0 0
    %191 = vmatpush2.bf16.msra.mxu0 0
    %192 = vmatprep.subr.bf16.mxu0 0
    %193 = vmatpush2.bf16.msra.mxu0 0
    %194 = vmatprep.mubr.bf16.mxu0 0
    %195 = vmatmul.mubr.bf16.gmra.mxu0 %v112
    %v196 = vpop.f32.mrf.mxu0
    %v197 = vadd.f32 %v106, %v196
    %v198 = vpop.f32.mrf.mxu0
    %v199 = vpop.f32.mrf.mxu0
    %v200 = vadd.f32 %v106, %v199
    %v201 = vpop.f32.mrf.mxu0
    %202 = vdwg.mxu0
    %v203 = vmax.f32 %v197, 0.0
    %v204 = vmax.f32 %v200, 0.0
    %v205 = vpack.c.bf16 %v204, %v203
    %v206 = vld [vmem:[#allocation7] sm:$0xf]
    %v207 = vld [vmem:[#allocation7 + $0x4] sm:$0xf]
    %v208 = vld [vmem:[#allocation7 + $0x8] sm:$0xf]
    %v209 = vld [vmem:[#allocation7 + $0xc] sm:$0xf]
    %v210 = vld [vmem:[#allocation7 + $0x10] sm:$0xf]
    %v211 = vld [vmem:[#allocation7 + $0x14] sm:$0xf]
    %v212 = vld [vmem:[#allocation7 + $0x18] sm:$0xf]
    %v213 = vld [vmem:[#allocation7 + $0x1c] sm:$0xf]
    %v214 = vld [vmem:[#allocation7 + $0x20] sm:$0xf]
    %v215 = vld [vmem:[#allocation7 + $0x24] sm:$0xf]
    %v216 = vld [vmem:[#allocation7 + $0x28] sm:$0xf]
    %v217 = vld [vmem:[#allocation7 + $0x2c] sm:$0xf]
    %v218 = vld [vmem:[#allocation7 + $0x30] sm:$0xf]
    %v219 = vld [vmem:[#allocation7 + $0x34] sm:$0xf]
    %v220 = vld [vmem:[#allocation7 + $0x38] sm:$0xf]
    %v221 = vld [vmem:[#allocation7 + $0x3c] sm:$0xf]
    %v222 = vld [vmem:[%s4] sm:$0x1]
    %v224 = vlaneseq
    %v225 = vshrl.u32 %v224, 7
    %v226 = vsub.s32 0, %v225
    %v227 = vrot.slane %v222, %v226
    %v245 = vunpack.c.l.b16 %v206
    %v246 = vunpack.c.l.b16 %v207
    %v247 = vunpack.c.l.b16 %v208
    %v248 = vunpack.c.l.b16 %v209
    %v249 = vunpack.c.l.b16 %v210
    %v250 = vunpack.c.l.b16 %v211
    %v251 = vunpack.c.l.b16 %v212
    %v252 = vunpack.c.l.b16 %v213
    %v253 = vunpack.c.l.b16 %v214
    %v254 = vunpack.c.l.b16 %v215
    %v255 = vunpack.c.l.b16 %v216
    %v256 = vunpack.c.l.b16 %v217
    %v257 = vunpack.c.l.b16 %v218
    %v258 = vunpack.c.l.b16 %v219
    %v259 = vunpack.c.l.b16 %v220
    %v260 = vunpack.c.l.b16 %v221
    %v261 = vpack.c.b16 %v246, %v245
    %v262 = vpack.c.b16 %v248, %v247
    %v263 = vpack.c.b16 %v250, %v249
    %v264 = vpack.c.b16 %v252, %v251
    %v265 = vpack.c.b16 %v254, %v253
    %v266 = vpack.c.b16 %v256, %v255
    %v267 = vpack.c.b16 %v258, %v257
    %v268 = vpack.c.b16 %v260, %v259
    %277 = vmatprep.subr.bf16.mxu0 0
    %278 = vmatpush1.bf16.msra.mxu0 %v268
    %279 = vmatprep.subr.bf16.mxu0 0
    %280 = vmatpush1.bf16.msra.mxu0 %v267
    %281 = vmatprep.subr.bf16.mxu0 0
    %282 = vmatpush1.bf16.msra.mxu0 %v266
    %283 = vmatprep.subr.bf16.mxu0 0
    %284 = vmatpush1.bf16.msra.mxu0 %v265
    %285 = vmatprep.subr.bf16.mxu0 0
    %286 = vmatpush1.bf16.msra.mxu0 %v264
    %287 = vmatprep.subr.bf16.mxu0 0
    %288 = vmatpush1.bf16.msra.mxu0 %v263
    %289 = vmatprep.subr.bf16.mxu0 0
    %290 = vmatpush1.bf16.msra.mxu0 %v262
    %291 = vmatprep.subr.bf16.mxu0 0
    %292 = vmatpush1.bf16.msra.mxu0 %v261
    %293 = vmatprep.subr.bf16.mxu0 0
    %294 = vmatpush2.bf16.msra.mxu0 0
    %295 = vmatprep.subr.bf16.mxu0 0
    %296 = vmatpush2.bf16.msra.mxu0 0
    %297 = vmatprep.subr.bf16.mxu0 0
    %298 = vmatpush2.bf16.msra.mxu0 0
    %299 = vmatprep.subr.bf16.mxu0 0
    %300 = vmatpush2.bf16.msra.mxu0 0
    %301 = vmatprep.subr.bf16.mxu0 0
    %302 = vmatpush2.bf16.msra.mxu0 0
    %303 = vmatprep.subr.bf16.mxu0 0
    %304 = vmatpush2.bf16.msra.mxu0 0
    %305 = vmatprep.subr.bf16.mxu0 0
    %306 = vmatpush2.bf16.msra.mxu0 0
    %307 = vmatprep.subr.bf16.mxu0 0
    %308 = vmatpush2.bf16.msra.mxu0 0
    %309 = vmatprep.mubr.bf16.mxu0 0
    %310 = vmatmul.mubr.bf16.gmra.mxu0 %v205
    %v311 = vpop.f32.mrf.mxu0
    %v312 = vadd.f32 %v227, %v311
    %v313 = vpop.f32.mrf.mxu0
    %v314 = vpop.f32.mrf.mxu0
    %v315 = vadd.f32 %v227, %v314
    %v316 = vpop.f32.mrf.mxu0
    %317 = vdwg.mxu0
    %v318 = vmax.f32 %v312, 0.0
    %v319 = vmax.f32 %v315, 0.0
    %v320 = vpack.c.bf16 %v319, %v318
    %v321 = vld [vmem:[#allocation8] sm:$0xf]
    %v322 = vld [vmem:[#allocation8 + $0x4] sm:$0xf]
    %v323 = vld [vmem:[#allocation8 + $0x8] sm:$0xf]
    %v324 = vld [vmem:[#allocation8 + $0xc] sm:$0xf]
    %v325 = vld [vmem:[#allocation8 + $0x10] sm:$0xf]
    %v326 = vld [vmem:[#allocation8 + $0x14] sm:$0xf]
    %v327 = vld [vmem:[#allocation8 + $0x18] sm:$0xf]
    %v328 = vld [vmem:[#allocation8 + $0x1c] sm:$0xf]
    %v329 = vld [vmem:[#allocation8 + $0x20] sm:$0xf]
    %v330 = vld [vmem:[#allocation8 + $0x24] sm:$0xf]
    %v331 = vld [vmem:[#allocation8 + $0x28] sm:$0xf]
    %v332 = vld [vmem:[#allocation8 + $0x2c] sm:$0xf]
    %v333 = vld [vmem:[#allocation8 + $0x30] sm:$0xf]
    %v334 = vld [vmem:[#allocation8 + $0x34] sm:$0xf]
    %v335 = vld [vmem:[#allocation8 + $0x38] sm:$0xf]
    %v336 = vld [vmem:[#allocation8 + $0x3c] sm:$0xf]
    %v337 = vld [vmem:[%s6] sm:$0x1]
    %v339 = vlaneseq
    %v340 = vshrl.u32 %v339, 7
    %v341 = vsub.s32 0, %v340
    %v342 = vrot.slane %v337, %v341
    %v360 = vunpack.c.l.b16 %v321
    %v361 = vunpack.c.l.b16 %v322
    %v362 = vunpack.c.l.b16 %v323
    %v363 = vunpack.c.l.b16 %v324
    %v364 = vunpack.c.l.b16 %v325
    %v365 = vunpack.c.l.b16 %v326
    %v366 = vunpack.c.l.b16 %v327
    %v367 = vunpack.c.l.b16 %v328
    %v368 = vunpack.c.l.b16 %v329
    %v369 = vunpack.c.l.b16 %v330
    %v370 = vunpack.c.l.b16 %v331
    %v371 = vunpack.c.l.b16 %v332
    %v372 = vunpack.c.l.b16 %v333
    %v373 = vunpack.c.l.b16 %v334
    %v374 = vunpack.c.l.b16 %v335
    %v375 = vunpack.c.l.b16 %v336
    %v376 = vpack.c.b16 %v361, %v360
    %v377 = vpack.c.b16 %v363, %v362
    %v378 = vpack.c.b16 %v365, %v364
    %v379 = vpack.c.b16 %v367, %v366
    %v380 = vpack.c.b16 %v369, %v368
    %v381 = vpack.c.b16 %v371, %v370
    %v382 = vpack.c.b16 %v373, %v372
    %v383 = vpack.c.b16 %v375, %v374
    %392 = vmatprep.subr.bf16.mxu0 0
    %393 = vmatpush1.bf16.msra.mxu0 %v383
    %394 = vmatprep.subr.bf16.mxu0 0
    %395 = vmatpush1.bf16.msra.mxu0 %v382
    %396 = vmatprep.subr.bf16.mxu0 0
    %397 = vmatpush1.bf16.msra.mxu0 %v381
    %398 = vmatprep.subr.bf16.mxu0 0
    %399 = vmatpush1.bf16.msra.mxu0 %v380
    %400 = vmatprep.subr.bf16.mxu0 0
    %401 = vmatpush1.bf16.msra.mxu0 %v379
    %402 = vmatprep.subr.bf16.mxu0 0
    %403 = vmatpush1.bf16.msra.mxu0 %v378
    %404 = vmatprep.subr.bf16.mxu0 0
    %405 = vmatpush1.bf16.msra.mxu0 %v377
    %406 = vmatprep.subr.bf16.mxu0 0
    %407 = vmatpush1.bf16.msra.mxu0 %v376
    %408 = vmatprep.subr.bf16.mxu0 0
    %409 = vmatpush2.bf16.msra.mxu0 0
    %410 = vmatprep.subr.bf16.mxu0 0
    %411 = vmatpush2.bf16.msra.mxu0 0
    %412 = vmatprep.subr.bf16.mxu0 0
    %413 = vmatpush2.bf16.msra.mxu0 0
    %414 = vmatprep.subr.bf16.mxu0 0
    %415 = vmatpush2.bf16.msra.mxu0 0
    %416 = vmatprep.subr.bf16.mxu0 0
    %417 = vmatpush2.bf16.msra.mxu0 0
    %418 = vmatprep.subr.bf16.mxu0 0
    %419 = vmatpush2.bf16.msra.mxu0 0
    %420 = vmatprep.subr.bf16.mxu0 0
    %421 = vmatpush2.bf16.msra.mxu0 0
    %422 = vmatprep.subr.bf16.mxu0 0
    %423 = vmatpush2.bf16.msra.mxu0 0
    %424 = vmatprep.mubr.bf16.mxu0 0
    %425 = vmatmul.mubr.bf16.gmra.mxu0 %v320
    %v426 = vpop.f32.mrf.mxu0
    %v427 = vadd.f32 %v342, %v426
    %v428 = vpop.f32.mrf.mxu0
    %v429 = vpop.f32.mrf.mxu0
    %v430 = vadd.f32 %v342, %v429
    %v431 = vpop.f32.mrf.mxu0
    %432 = vdwg.mxu0
    %v433 = vpack.c.bf16 %v430, %v427
    %v435 = vunpack.c.l.b16 %v433
    %v436 = vunpack.c.h.b16 %v433
    %v437 = vpack.c.b16 %v435, %v435
    %v438 = vpack.c.b16 %v436, %v436
    %441 = vst [vmem:[#allocation10] sm:$0xf] %v437
    %442 = vst [vmem:[#allocation10 + $0x4] sm:$0xf] %v438
    // Predicated region
    $region46: #{tpu_custom_call.1} parent=1 // pred_check
      _
    $region47: #{tpu_custom_call.1} parent=1 // pred_check_branch
      %444 = sbr.rel (0) target = $region49
    $region48: #{tpu_custom_call.1} parent=1 // pred_region
      %s446 = ssub.s32 128, 128
      %447 = vsyncadd [#allocation4], %s446
      %s448 = sshll.u32 [#allocation10], 4
      %s449 = int_to_ptr.vmem [resolvable:$true] %s448
      %454 = dma.vmem_to_hbm [thread:$0]  %s449, 128, %s7, [#allocation4], 64, 64, 4
    $region49: #{tpu_custom_call.1} parent=1 // pred_fallthru
      _
    // Predicated region
    $region50: #{tpu_custom_call.1} parent=1 // pred_check
      _
    $region51: #{tpu_custom_call.1} parent=1 // pred_check_branch
      %456 = sbr.rel (0) target = $region53
    $region52: #{tpu_custom_call.1} parent=1 // pred_region
      %457 = dma.done [#allocation4], 128
    $region53: #{tpu_custom_call.1} parent=1 // pred_fallthru
      _
    %458 = vsyncpa [#allocation3], 1
    %459 = vsyncpa [#allocation6], 1
    %460 = vsyncpa [#allocation9], 1
    %461 = vsyncpa [#allocation4], 1

</llo_original>
